<compile_context>
chip_gen: v5e
topology: v5e:2x2
jax: 0.10.0
libtpu: 0.0.40
codegen_flags: <defaults>
</compile_context>

<pallas_src>
import jax
import jax.numpy as jnp
from jax.experimental import pallas as pl
from jax.experimental.pallas import tpu as pltpu


def vae_kernel(x_ref, we_ref, be_ref, wh_ref, bh_ref, wd_ref, bd_ref, eps_ref,
               recon_ref, mulv_ref):
    L = eps_ref.shape[-1]

    # encoder: h = relu(x @ We + be)   (bf16 operands, f32 accumulation on MXU)
    h = jnp.dot(x_ref[...].astype(jnp.bfloat16), we_ref[...],
                preferred_element_type=jnp.float32)
    h = jnp.maximum(h + be_ref[...], 0.0)                       # [bt, 128] f32

    # fused mu/logvar heads: single matmul, result is [mu | logvar]
    mulv = jnp.dot(h, wh_ref[...],
                   preferred_element_type=jnp.float32) + bh_ref[...]   # [bt, 2L]
    mu = mulv[:, :L]
    logvar = mulv[:, L:]

    # reparameterize: z = mu + exp(0.5 * logvar) * eps
    z = mu + jnp.exp(0.5 * logvar) * eps_ref[...]               # [bt, L]

    # decoder: K = L = 2 contraction -> VPU outer-product accumulate instead of
    # pushing a 2-row matmul through the systolic array.
    rec = bd_ref[...] + z[:, 0:1] * wd_ref[0:1, :]              # [bt, 784]
    for l in range(1, L):                                       # static unroll
        rec = rec + z[:, l:l + 1] * wd_ref[l:l + 1, :]

    recon_ref[...] = jax.nn.sigmoid(rec)
    mulv_ref[...] = mulv


def _pick_batch_tile(B):
    # Whole batch in one tile when small; otherwise a VMEM-friendly tile that
    # also fits v7x's smaller (64 MiB physical / 32 MiB scoped) VMEM.
    if B <= 512:
        return B
    for bt in (512, 256, 128, 64, 32, 16, 8):
        if B % bt == 0:
            return bt
    return B


def prepare_kernel_params(params):
    """One-time conversion of PyTorch-layout params (weights [out, in]) to the
    kernel layout. Call once at init -- NOT on every forward."""
    H = params["b_enc"].shape[0]
    L = params["b_mu"].shape[0]
    D = params["b_dec"].shape[0]
    w_heads = jnp.concatenate([params["w_mu"].T, params["w_logvar"].T], axis=1)
    b_heads = jnp.concatenate([params["b_mu"], params["b_logvar"]]).reshape(1, 2 * L)
    return {
        "we": params["w_enc"].T.astype(jnp.bfloat16),    # [784, 128] bf16
        "be": params["b_enc"].reshape(1, H).astype(jnp.float32),
        "wh": w_heads.astype(jnp.float32),               # [128, 2L]
        "bh": b_heads.astype(jnp.float32),               # [1, 2L]
        "wd": params["w_dec"].T.astype(jnp.float32),     # [L, 784]
        "bd": params["b_dec"].reshape(1, D).astype(jnp.float32),   # [1, 784]
    }


@jax.jit
def vae_forward(x, kparams, eps):
    """x: [B, 784] f32, eps: [B, L] f32 (the randn_like draw).
    Returns (x_reconstructed, mu, logvar)."""
    B, D = x.shape
    H = kparams["we"].shape[1]
    L = kparams["wd"].shape[0]
    bt = _pick_batch_tile(B)
    grid = (B // bt,)

    const = lambda i: (0, 0)        # weights/biases: same block every step -> VMEM-resident
    in_specs = [
        pl.BlockSpec((bt, D), lambda i: (i, 0)),        # x
        pl.BlockSpec((D, H), const),                    # we  (bf16)
        pl.BlockSpec((1, H), const),                    # be
        pl.BlockSpec((H, 2 * L), const),                # wh  (fused heads)
        pl.BlockSpec((1, 2 * L), const),                # bh
        pl.BlockSpec((L, D), const),                    # wd
        pl.BlockSpec((1, D), const),                    # bd
        pl.BlockSpec((bt, L), lambda i: (i, 0)),        # eps
    ]
    out_specs = (
        pl.BlockSpec((bt, D), lambda i: (i, 0)),        # recon
        pl.BlockSpec((bt, 2 * L), lambda i: (i, 0)),    # [mu | logvar]
    )
    out_shapes = (
        jax.ShapeDtypeStruct((B, D), jnp.float32),
        jax.ShapeDtypeStruct((B, 2 * L), jnp.float32),
    )

    recon, mulv = pl.pallas_call(
        vae_kernel,
        out_shape=out_shapes,
        grid=grid,
        in_specs=in_specs,
        out_specs=out_specs,
        compiler_params=pltpu.CompilerParams(
            dimension_semantics=("parallel",)),
    )(x, kparams["we"], kparams["be"], kparams["wh"], kparams["bh"],
      kparams["wd"], kparams["bd"], eps)

    return recon, mulv[:, :L], mulv[:, L:]


def init_params(key, latent_dim=2, in_dim=784, hidden=128):
    """Deterministic synthetic init with PyTorch nn.Linear weight shapes [out, in]."""
    ks = jax.random.split(key, 8)

    def lin(kw, kb, out_f, in_f):
        scale = 1.0 / jnp.sqrt(in_f)
        w = jax.random.uniform(kw, (out_f, in_f), jnp.float32, -scale, scale)
        b = jax.random.uniform(kb, (out_f,), jnp.float32, -scale, scale)
        return w, b

    w_enc, b_enc = lin(ks[0], ks[1], hidden, in_dim)
    w_mu, b_mu = lin(ks[2], ks[3], latent_dim, hidden)
    w_lv, b_lv = lin(ks[4], ks[5], latent_dim, hidden)
    w_dec, b_dec = lin(ks[6], ks[7], in_dim, latent_dim)
    return {
        "w_enc": w_enc, "b_enc": b_enc,
        "w_mu": w_mu, "b_mu": b_mu,
        "w_logvar": w_lv, "b_logvar": b_lv,
        "w_dec": w_dec, "b_dec": b_dec,
    }


def vae_reference(x, params, eps):
    """Pure-JAX f32 reference mirroring the PyTorch forward."""
    h = jax.nn.relu(x @ params["w_enc"].T + params["b_enc"])
    mu = h @ params["w_mu"].T + params["b_mu"]
    logvar = h @ params["w_logvar"].T + params["b_logvar"]
    z = mu + jnp.exp(0.5 * logvar) * eps
    recon = jax.nn.sigmoid(z @ params["w_dec"].T + params["b_dec"])
    return recon, mu, logvar


if __name__ == "__main__":
    key = jax.random.PRNGKey(0)
    k_param, k_x, k_eps = jax.random.split(key, 3)

    B, IN_DIM, LATENT = 8, 784, 2
    params = init_params(k_param, latent_dim=LATENT, in_dim=IN_DIM)
    kparams = prepare_kernel_params(params)      # one-time layout conversion
    x = jax.random.normal(k_x, (B, IN_DIM), jnp.float32)
    # randn_like(std) in the PyTorch module -> draw eps outside the kernel so
    # the kernel and the reference use the same noise.
    eps = jax.random.normal(k_eps, (B, LATENT), jnp.float32)

    recon, mu, logvar = vae_forward(x, kparams, eps)
    jax.block_until_ready((recon, mu, logvar))

    ref_recon, ref_mu, ref_logvar = vae_reference(x, params, eps)
    assert recon.shape == (B, IN_DIM) and mu.shape == (B, LATENT) and logvar.shape == (B, LATENT)
    # Tolerance loosened vs the pure-f32 version because the encoder weight /
    # activations are bf16 (f32 accumulation); observed error is ~1e-3.
    assert jnp.allclose(recon, ref_recon, atol=2e-2, rtol=2e-2)
    assert jnp.allclose(mu, ref_mu, atol=2e-2, rtol=2e-2)
    assert jnp.allclose(logvar, ref_logvar, atol=2e-2, rtol=2e-2)

    print("KERNEL_OK")
</pallas_src>

<mosaic_0001>
module attributes {stable_mosaic.version = 11 : i64} {
  func.func @vae_kernel(%arg0: i32, %arg1: memref<8x784xf32, #tpu.memory_space<vmem>>, %arg2: memref<784x128xbf16, #tpu.memory_space<vmem>>, %arg3: memref<1x128xf32, #tpu.memory_space<vmem>>, %arg4: memref<128x4xf32, #tpu.memory_space<vmem>>, %arg5: memref<1x4xf32, #tpu.memory_space<vmem>>, %arg6: memref<2x784xf32, #tpu.memory_space<vmem>>, %arg7: memref<1x784xf32, #tpu.memory_space<vmem>>, %arg8: memref<8x2xf32, #tpu.memory_space<vmem>>, %arg9: memref<8x784xf32, #tpu.memory_space<vmem>>, %arg10: memref<8x4xf32, #tpu.memory_space<vmem>>) attributes {dimension_semantics = [#tpu.dimension_semantics<parallel>], iteration_bounds = array<i64: 1>, scalar_prefetch = 0 : i64, scratch_operands = 0 : i64, tpu.core_type = #tpu.core_type<tc>, window_params = [{transform_indices = @transform_0, window_bounds = array<i64: 8, 784>}, {pipeline_mode = #tpu.pipeline_mode<synchronous>, transform_indices = @transform_1, window_bounds = array<i64: 784, 128>}, {pipeline_mode = #tpu.pipeline_mode<synchronous>, transform_indices = @transform_2, window_bounds = array<i64: 1, 128>}, {pipeline_mode = #tpu.pipeline_mode<synchronous>, transform_indices = @transform_3, window_bounds = array<i64: 128, 4>}, {pipeline_mode = #tpu.pipeline_mode<synchronous>, transform_indices = @transform_4, window_bounds = array<i64: 1, 4>}, {pipeline_mode = #tpu.pipeline_mode<synchronous>, transform_indices = @transform_5, window_bounds = array<i64: 2, 784>}, {pipeline_mode = #tpu.pipeline_mode<synchronous>, transform_indices = @transform_6, window_bounds = array<i64: 1, 784>}, {transform_indices = @transform_7, window_bounds = array<i64: 8, 2>}, {transform_indices = @transform_8, window_bounds = array<i64: 8, 784>}, {transform_indices = @transform_9, window_bounds = array<i64: 8, 4>}]} {
    %c0 = arith.constant 0 : index
    %c0_0 = arith.constant 0 : index
    %0 = vector.load %arg1[%c0, %c0_0] : memref<8x784xf32, #tpu.memory_space<vmem>>, vector<8x784xf32>
    %1 = arith.truncf %0 : vector<8x784xf32> to vector<8x784xbf16>
    %c0_1 = arith.constant 0 : index
    %c0_2 = arith.constant 0 : index
    %2 = vector.load %arg2[%c0_1, %c0_2] : memref<784x128xbf16, #tpu.memory_space<vmem>>, vector<784x128xbf16>
    %cst = arith.constant dense<0.000000e+00> : vector<8x128xf32>
    %3 = tpu.matmul %1, %2, %cst {dimension_numbers = #tpu.dot_dimension_numbers<[1], [0], [0], [1], [0, 0, 1, 1], [], []>} : vector<8x784xbf16>, vector<784x128xbf16>, vector<8x128xf32> -> vector<8x128xf32>
    %c0_3 = arith.constant 0 : index
    %c0_4 = arith.constant 0 : index
    %4 = vector.load %arg3[%c0_3, %c0_4] : memref<1x128xf32, #tpu.memory_space<vmem>>, vector<1x128xf32>
    %5 = vector.broadcast %4 : vector<1x128xf32> to vector<8x128xf32>
    %6 = arith.addf %3, %5 : vector<8x128xf32>
    %cst_5 = arith.constant 0.000000e+00 : f32
    %7 = vector.broadcast %cst_5 : f32 to vector<8x128xf32>
    %8 = arith.maximumf %6, %7 : vector<8x128xf32>
    %c0_6 = arith.constant 0 : index
    %c0_7 = arith.constant 0 : index
    %9 = vector.load %arg4[%c0_6, %c0_7] : memref<128x4xf32, #tpu.memory_space<vmem>>, vector<128x4xf32>
    %cst_8 = arith.constant dense<0.000000e+00> : vector<8x4xf32>
    %10 = tpu.matmul %8, %9, %cst_8 {dimension_numbers = #tpu.dot_dimension_numbers<[1], [0], [0], [1], [0, 0, 1, 1], [], []>} : vector<8x128xf32>, vector<128x4xf32>, vector<8x4xf32> -> vector<8x4xf32>
    %c0_9 = arith.constant 0 : index
    %c0_10 = arith.constant 0 : index
    %11 = vector.load %arg5[%c0_9, %c0_10] : memref<1x4xf32, #tpu.memory_space<vmem>>, vector<1x4xf32>
    %12 = vector.broadcast %11 : vector<1x4xf32> to vector<8x4xf32>
    %13 = arith.addf %10, %12 : vector<8x4xf32>
    %14 = vector.extract_strided_slice %13 {offsets = [0, 0], sizes = [8, 2], strides = [1, 1]} : vector<8x4xf32> to vector<8x2xf32>
    %15 = vector.extract_strided_slice %13 {offsets = [0, 2], sizes = [8, 2], strides = [1, 1]} : vector<8x4xf32> to vector<8x2xf32>
    %cst_11 = arith.constant 5.000000e-01 : f32
    %16 = vector.broadcast %cst_11 : f32 to vector<8x2xf32>
    %17 = arith.mulf %16, %15 : vector<8x2xf32>
    %18 = math.exp %17 : vector<8x2xf32>
    %c0_12 = arith.constant 0 : index
    %c0_13 = arith.constant 0 : index
    %19 = vector.load %arg8[%c0_12, %c0_13] : memref<8x2xf32, #tpu.memory_space<vmem>>, vector<8x2xf32>
    %20 = arith.mulf %18, %19 : vector<8x2xf32>
    %21 = arith.addf %14, %20 : vector<8x2xf32>
    %c0_14 = arith.constant 0 : index
    %c0_15 = arith.constant 0 : index
    %22 = vector.load %arg7[%c0_14, %c0_15] : memref<1x784xf32, #tpu.memory_space<vmem>>, vector<1x784xf32>
    %23 = vector.extract_strided_slice %21 {offsets = [0, 0], sizes = [8, 1], strides = [1, 1]} : vector<8x2xf32> to vector<8x1xf32>
    %c0_16 = arith.constant 0 : index
    %c0_17 = arith.constant 0 : index
    %24 = vector.load %arg6[%c0_16, %c0_17] : memref<2x784xf32, #tpu.memory_space<vmem>>, vector<1x784xf32>
    %25 = vector.broadcast %23 : vector<8x1xf32> to vector<8x784xf32>
    %26 = vector.broadcast %24 : vector<1x784xf32> to vector<8x784xf32>
    %27 = arith.mulf %25, %26 : vector<8x784xf32>
    %28 = vector.broadcast %22 : vector<1x784xf32> to vector<8x784xf32>
    %29 = arith.addf %28, %27 : vector<8x784xf32>
    %30 = vector.extract_strided_slice %21 {offsets = [0, 1], sizes = [8, 1], strides = [1, 1]} : vector<8x2xf32> to vector<8x1xf32>
    %c1 = arith.constant 1 : index
    %c0_18 = arith.constant 0 : index
    %31 = vector.load %arg6[%c1, %c0_18] : memref<2x784xf32, #tpu.memory_space<vmem>>, vector<1x784xf32>
    %32 = vector.broadcast %30 : vector<8x1xf32> to vector<8x784xf32>
    %33 = vector.broadcast %31 : vector<1x784xf32> to vector<8x784xf32>
    %34 = arith.mulf %32, %33 : vector<8x784xf32>
    %35 = arith.addf %29, %34 : vector<8x784xf32>
    %36 = arith.negf %35 : vector<8x784xf32>
    %37 = math.exp %36 : vector<8x784xf32>
    %cst_19 = arith.constant 1.000000e+00 : f32
    %38 = vector.broadcast %cst_19 : f32 to vector<8x784xf32>
    %39 = arith.addf %38, %37 : vector<8x784xf32>
    %40 = arith.divf %38, %39 : vector<8x784xf32>
    %c0_20 = arith.constant 0 : index
    %c0_21 = arith.constant 0 : index
    %41 = vector.load %arg9[%c0_20, %c0_21] : memref<8x784xf32, #tpu.memory_space<vmem>>, vector<8x784xf32>
    tpu.vector_store %arg9[%c0_20, %c0_21], %40 {strides = array<i32>} : memref<8x784xf32, #tpu.memory_space<vmem>>, vector<8x784xf32>,
    %c0_22 = arith.constant 0 : index
    %c0_23 = arith.constant 0 : index
    %42 = vector.load %arg10[%c0_22, %c0_23] : memref<8x4xf32, #tpu.memory_space<vmem>>, vector<8x4xf32>
    tpu.vector_store %arg10[%c0_22, %c0_23], %13 {strides = array<i32>} : memref<8x4xf32, #tpu.memory_space<vmem>>, vector<8x4xf32>,
    return
  }
  func.func @transform_0(%arg0: i32) -> (i32, i32) {
    %c0_i32 = arith.constant 0 : i32
    %c0_i32_0 = arith.constant 0 : i32
    return %arg0, %c0_i32 : i32, i32
  }
  func.func @transform_1(%arg0: i32) -> (i32, i32) {
    %c0_i32 = arith.constant 0 : i32
    %c0_i32_0 = arith.constant 0 : i32
    %c0_i32_1 = arith.constant 0 : i32
    return %c0_i32, %c0_i32_0 : i32, i32
  }
  func.func @transform_2(%arg0: i32) -> (i32, i32) {
    %c0_i32 = arith.constant 0 : i32
    %c0_i32_0 = arith.constant 0 : i32
    %c0_i32_1 = arith.constant 0 : i32
    return %c0_i32, %c0_i32_0 : i32, i32
  }
  func.func @transform_3(%arg0: i32) -> (i32, i32) {
    %c0_i32 = arith.constant 0 : i32
    %c0_i32_0 = arith.constant 0 : i32
    %c0_i32_1 = arith.constant 0 : i32
    return %c0_i32, %c0_i32_0 : i32, i32
  }
  func.func @transform_4(%arg0: i32) -> (i32, i32) {
    %c0_i32 = arith.constant 0 : i32
    %c0_i32_0 = arith.constant 0 : i32
    %c0_i32_1 = arith.constant 0 : i32
    return %c0_i32, %c0_i32_0 : i32, i32
  }
  func.func @transform_5(%arg0: i32) -> (i32, i32) {
    %c0_i32 = arith.constant 0 : i32
    %c0_i32_0 = arith.constant 0 : i32
    %c0_i32_1 = arith.constant 0 : i32
    return %c0_i32, %c0_i32_0 : i32, i32
  }
  func.func @transform_6(%arg0: i32) -> (i32, i32) {
    %c0_i32 = arith.constant 0 : i32
    %c0_i32_0 = arith.constant 0 : i32
    %c0_i32_1 = arith.constant 0 : i32
    return %c0_i32, %c0_i32_0 : i32, i32
  }
  func.func @transform_7(%arg0: i32) -> (i32, i32) {
    %c0_i32 = arith.constant 0 : i32
    %c0_i32_0 = arith.constant 0 : i32
    return %arg0, %c0_i32 : i32, i32
  }
  func.func @transform_8(%arg0: i32) -> (i32, i32) {
    %c0_i32 = arith.constant 0 : i32
    %c0_i32_0 = arith.constant 0 : i32
    return %arg0, %c0_i32 : i32, i32
  }
  func.func @transform_9(%arg0: i32) -> (i32, i32) {
    %c0_i32 = arith.constant 0 : i32
    %c0_i32_0 = arith.constant 0 : i32
    return %arg0, %c0_i32 : i32, i32
  }
}

</mosaic_0001>

<llo_original>
// kernel: vae_forward.1
$region0: #{vae_forward.1}
  #allocation0 [shape = 'u32[]', space=smem, size = 0x4, offset = 0x4, fixed_abs, tag = 'smem constant byte address 0x4 - core index']
  #allocation1 [shape = 'u32[72,128]{1,0:T(1,128)}', space=vmem, size = 0x9000, scoped, tag = 'internal scratch']
  %s0 = inlined_call_operand.vmem [shape: f32[8,784], index: 0, kind: input, shape index: {}]
  %s1 = inlined_call_operand.hbm [shape: bf16[784,128], index: 1, kind: input, shape index: {}]
  %s2 = inlined_call_operand.vmem [shape: f32[1,128], index: 2, kind: input, shape index: {}]
  %s3 = inlined_call_operand.vmem [shape: f32[128,4], index: 3, kind: input, shape index: {}]
  %s4 = inlined_call_operand.vmem [shape: f32[1,4], index: 4, kind: input, shape index: {}]
  %s5 = inlined_call_operand.vmem [shape: f32[2,784], index: 5, kind: input, shape index: {}]
  %s6 = inlined_call_operand.vmem [shape: f32[1,784], index: 6, kind: input, shape index: {}]
  %s7 = inlined_call_operand.vmem [shape: f32[8,2], index: 7, kind: input, shape index: {}]
  %s8 = inlined_call_operand.hbm [shape: f32[8,784], index: 8, kind: output, shape index: {0}]
  %s9 = inlined_call_operand.vmem [shape: f32[8,4], index: 9, kind: output, shape index: {1}]
  %10 = xla_tuple %s8, %s9
  %s11 = sld [smem:[#allocation0]]
  $region54: #{vae_forward.1} parent=0
    _
  %s13 = ssub.s32 1, %s11
  %s14 = scalar_select 0, %s13, %s11
  $region1: #{vae_forward.1} parent=0
    #allocation2 [shape = 'u8[200704]{0}', space=vmem, size = 0x31000, scoped, tag = 'input window, operand 1, single buffered']
    #allocation3 [shape = 's32[1]{0}', space=sflag, size = 0x4, scoped, tag = 'scoped memory for vae_forward.1']
    #allocation4 [shape = 's32[1]{0}', space=sflag, size = 0x4, scoped, tag = 'scoped memory for vae_forward.1']
    #allocation5 [shape = 'u8[28672]{0}', space=vmem, size = 0x7000, scoped, tag = 'output window, operand 0, single buffered']
    %15 = vsyncpa [#allocation3], 0
    %16 = vsyncpa [#allocation4], 0
    // Predicated region
    $region2: #{vae_forward.1} parent=1 // pred_check
      _
    $region3: #{vae_forward.1} parent=1 // pred_check_branch
      %18 = sbr.rel (0) target = $region5
    $region4: #{vae_forward.1} parent=1 // pred_region
      _
    $region5: #{vae_forward.1} parent=1 // pred_fallthru
      _
    // Predicated region
    $region6: #{vae_forward.1} parent=1 // pred_check
      _
    $region7: #{vae_forward.1} parent=1 // pred_check_branch
      %20 = sbr.rel (0) target = $region9
    $region8: #{vae_forward.1} parent=1 // pred_region
      %22 = vsyncadd [#allocation3], 0
      %s23 = sshll.u32 %s1, 4
      %s24 = int_to_ptr.hbm [resolvable:$true] %s23
      %s25 = sshll.u32 [#allocation2], 4
      %s26 = int_to_ptr.vmem [resolvable:$true] %s25
      %31 = dma.hbm_to_vmem [thread:$0]  %s24, 6272, %s26, [#allocation3], 64, 64, 4
    $region9: #{vae_forward.1} parent=1 // pred_fallthru
      _
    // Predicated region
    $region10: #{vae_forward.1} parent=1 // pred_check
      _
    $region11: #{vae_forward.1} parent=1 // pred_check_branch
      %33 = sbr.rel (0) target = $region13
    $region12: #{vae_forward.1} parent=1 // pred_region
      _
    $region13: #{vae_forward.1} parent=1 // pred_fallthru
      _
    // Predicated region
    $region14: #{vae_forward.1} parent=1 // pred_check
      _
    $region15: #{vae_forward.1} parent=1 // pred_check_branch
      %35 = sbr.rel (0) target = $region17
    $region16: #{vae_forward.1} parent=1 // pred_region
      _
    $region17: #{vae_forward.1} parent=1 // pred_fallthru
      _
    // Predicated region
    $region18: #{vae_forward.1} parent=1 // pred_check
      _
    $region19: #{vae_forward.1} parent=1 // pred_check_branch
      %37 = sbr.rel (0) target = $region21
    $region20: #{vae_forward.1} parent=1 // pred_region
      _
    $region21: #{vae_forward.1} parent=1 // pred_fallthru
      _
    // Predicated region
    $region22: #{vae_forward.1} parent=1 // pred_check
      _
    $region23: #{vae_forward.1} parent=1 // pred_check_branch
      %39 = sbr.rel (0) target = $region25
    $region24: #{vae_forward.1} parent=1 // pred_region
      _
    $region25: #{vae_forward.1} parent=1 // pred_fallthru
      _
    // Predicated region
    $region26: #{vae_forward.1} parent=1 // pred_check
      _
    $region27: #{vae_forward.1} parent=1 // pred_check_branch
      %41 = sbr.rel (0) target = $region29
    $region28: #{vae_forward.1} parent=1 // pred_region
      _
    $region29: #{vae_forward.1} parent=1 // pred_fallthru
      _
    // Predicated region
    $region30: #{vae_forward.1} parent=1 // pred_check
      _
    $region31: #{vae_forward.1} parent=1 // pred_check_branch
      %43 = sbr.rel (0) target = $region33
    $region32: #{vae_forward.1} parent=1 // pred_region
      _
    $region33: #{vae_forward.1} parent=1 // pred_fallthru
      _
    // Predicated region
    $region34: #{vae_forward.1} parent=1 // pred_check
      _
    $region35: #{vae_forward.1} parent=1 // pred_check_branch
      %45 = sbr.rel (0) target = $region37
    $region36: #{vae_forward.1} parent=1 // pred_region
      %47 = dma.done [#allocation3], 6272
    $region37: #{vae_forward.1} parent=1 // pred_fallthru
      _
    %v49 = vld [vmem:[%s0] sm:$0xff]
    %v50 = vld [vmem:[%s0 + $0x8] sm:$0xff]
    %v51 = vld [vmem:[%s0 + $0x10] sm:$0xff]
    %v52 = vld [vmem:[%s0 + $0x18] sm:$0xff]
    %v53 = vld [vmem:[%s0 + $0x20] sm:$0xff]
    %v54 = vld [vmem:[%s0 + $0x28] sm:$0xff]
    %v55 = vld [vmem:[%s0 + $0x30] sm:$0xff]
    %v56 = vpack.c.bf16 %v49, %v49
    %v57 = vpack.c.bf16 %v50, %v50
    %v58 = vpack.c.bf16 %v51, %v51
    %v59 = vpack.c.bf16 %v52, %v52
    %v60 = vpack.c.bf16 %v53, %v53
    %v61 = vpack.c.bf16 %v54, %v54
    %v62 = vpack.c.bf16 %v55, %v55
    %v63 = vld [vmem:[#allocation2] sm:$0xf]
    %v64 = vld [vmem:[#allocation2 + $0x4] sm:$0xf]
    %v65 = vld [vmem:[#allocation2 + $0x8] sm:$0xf]
    %v66 = vld [vmem:[#allocation2 + $0xc] sm:$0xf]
    %v67 = vld [vmem:[#allocation2 + $0x10] sm:$0xf]
    %v68 = vld [vmem:[#allocation2 + $0x14] sm:$0xf]
    %v69 = vld [vmem:[#allocation2 + $0x18] sm:$0xf]
    %v70 = vld [vmem:[#allocation2 + $0x1c] sm:$0xf]
    %v71 = vld [vmem:[#allocation2 + $0x20] sm:$0xf]
    %v72 = vld [vmem:[#allocation2 + $0x24] sm:$0xf]
    %v73 = vld [vmem:[#allocation2 + $0x28] sm:$0xf]
    %v74 = vld [vmem:[#allocation2 + $0x2c] sm:$0xf]
    %v75 = vld [vmem:[#allocation2 + $0x30] sm:$0xf]
    %v76 = vld [vmem:[#allocation2 + $0x34] sm:$0xf]
    %v77 = vld [vmem:[#allocation2 + $0x38] sm:$0xf]
    %v78 = vld [vmem:[#allocation2 + $0x3c] sm:$0xf]
    %v79 = vld [vmem:[#allocation2 + $0x40] sm:$0xf]
    %v80 = vld [vmem:[#allocation2 + $0x44] sm:$0xf]
    %v81 = vld [vmem:[#allocation2 + $0x48] sm:$0xf]
    %v82 = vld [vmem:[#allocation2 + $0x4c] sm:$0xf]
    %v83 = vld [vmem:[#allocation2 + $0x50] sm:$0xf]
    %v84 = vld [vmem:[#allocation2 + $0x54] sm:$0xf]
    %v85 = vld [vmem:[#allocation2 + $0x58] sm:$0xf]
    %v86 = vld [vmem:[#allocation2 + $0x5c] sm:$0xf]
    %v87 = vld [vmem:[#allocation2 + $0x60] sm:$0xf]
    %v88 = vld [vmem:[#allocation2 + $0x64] sm:$0xf]
    %v89 = vld [vmem:[#allocation2 + $0x68] sm:$0xf]
    %v90 = vld [vmem:[#allocation2 + $0x6c] sm:$0xf]
    %v91 = vld [vmem:[#allocation2 + $0x70] sm:$0xf]
    %v92 = vld [vmem:[#allocation2 + $0x74] sm:$0xf]
    %v93 = vld [vmem:[#allocation2 + $0x78] sm:$0xf]
    %v94 = vld [vmem:[#allocation2 + $0x7c] sm:$0xf]
    %v95 = vld [vmem:[#allocation2 + $0x80] sm:$0xf]
    %v96 = vld [vmem:[#allocation2 + $0x84] sm:$0xf]
    %v97 = vld [vmem:[#allocation2 + $0x88] sm:$0xf]
    %v98 = vld [vmem:[#allocation2 + $0x8c] sm:$0xf]
    %v99 = vld [vmem:[#allocation2 + $0x90] sm:$0xf]
    %v100 = vld [vmem:[#allocation2 + $0x94] sm:$0xf]
    %v101 = vld [vmem:[#allocation2 + $0x98] sm:$0xf]
    %v102 = vld [vmem:[#allocation2 + $0x9c] sm:$0xf]
    %v103 = vld [vmem:[#allocation2 + $0xa0] sm:$0xf]
    %v104 = vld [vmem:[#allocation2 + $0xa4] sm:$0xf]
    %v105 = vld [vmem:[#allocation2 + $0xa8] sm:$0xf]
    %v106 = vld [vmem:[#allocation2 + $0xac] sm:$0xf]
    %v107 = vld [vmem:[#allocation2 + $0xb0] sm:$0xf]
    %v108 = vld [vmem:[#allocation2 + $0xb4] sm:$0xf]
    %v109 = vld [vmem:[#allocation2 + $0xb8] sm:$0xf]
    %v110 = vld [vmem:[#allocation2 + $0xbc] sm:$0xf]
    %v111 = vld [vmem:[#allocation2 + $0xc0] sm:$0xf]
    %v112 = vld [vmem:[#allocation2 + $0xc4] sm:$0xf]
    %v113 = vld [vmem:[#allocation2 + $0xc8] sm:$0xf]
    %v114 = vld [vmem:[#allocation2 + $0xcc] sm:$0xf]
    %v115 = vld [vmem:[#allocation2 + $0xd0] sm:$0xf]
    %v116 = vld [vmem:[#allocation2 + $0xd4] sm:$0xf]
    %v117 = vld [vmem:[#allocation2 + $0xd8] sm:$0xf]
    %v118 = vld [vmem:[#allocation2 + $0xdc] sm:$0xf]
    %v119 = vld [vmem:[#allocation2 + $0xe0] sm:$0xf]
    %v120 = vld [vmem:[#allocation2 + $0xe4] sm:$0xf]
    %v121 = vld [vmem:[#allocation2 + $0xe8] sm:$0xf]
    %v122 = vld [vmem:[#allocation2 + $0xec] sm:$0xf]
    %v123 = vld [vmem:[#allocation2 + $0xf0] sm:$0xf]
    %v124 = vld [vmem:[#allocation2 + $0xf4] sm:$0xf]
    %v125 = vld [vmem:[#allocation2 + $0xf8] sm:$0xf]
    %v126 = vld [vmem:[#allocation2 + $0xfc] sm:$0xf]
    %v127 = vld [vmem:[#allocation2 + $0x100] sm:$0xf]
    %v128 = vld [vmem:[#allocation2 + $0x104] sm:$0xf]
    %v129 = vld [vmem:[#allocation2 + $0x108] sm:$0xf]
    %v130 = vld [vmem:[#allocation2 + $0x10c] sm:$0xf]
    %v131 = vld [vmem:[#allocation2 + $0x110] sm:$0xf]
    %v132 = vld [vmem:[#allocation2 + $0x114] sm:$0xf]
    %v133 = vld [vmem:[#allocation2 + $0x118] sm:$0xf]
    %v134 = vld [vmem:[#allocation2 + $0x11c] sm:$0xf]
    %v135 = vld [vmem:[#allocation2 + $0x120] sm:$0xf]
    %v136 = vld [vmem:[#allocation2 + $0x124] sm:$0xf]
    %v137 = vld [vmem:[#allocation2 + $0x128] sm:$0xf]
    %v138 = vld [vmem:[#allocation2 + $0x12c] sm:$0xf]
    %v139 = vld [vmem:[#allocation2 + $0x130] sm:$0xf]
    %v140 = vld [vmem:[#allocation2 + $0x134] sm:$0xf]
    %v141 = vld [vmem:[#allocation2 + $0x138] sm:$0xf]
    %v142 = vld [vmem:[#allocation2 + $0x13c] sm:$0xf]
    %v143 = vld [vmem:[#allocation2 + $0x140] sm:$0xf]
    %v144 = vld [vmem:[#allocation2 + $0x144] sm:$0xf]
    %v145 = vld [vmem:[#allocation2 + $0x148] sm:$0xf]
    %v146 = vld [vmem:[#allocation2 + $0x14c] sm:$0xf]
    %v147 = vld [vmem:[#allocation2 + $0x150] sm:$0xf]
    %v148 = vld [vmem:[#allocation2 + $0x154] sm:$0xf]
    %v149 = vld [vmem:[#allocation2 + $0x158] sm:$0xf]
    %v150 = vld [vmem:[#allocation2 + $0x15c] sm:$0xf]
    %v151 = vld [vmem:[#allocation2 + $0x160] sm:$0xf]
    %v152 = vld [vmem:[#allocation2 + $0x164] sm:$0xf]
    %v153 = vld [vmem:[#allocation2 + $0x168] sm:$0xf]
    %v154 = vld [vmem:[#allocation2 + $0x16c] sm:$0xf]
    %v155 = vld [vmem:[#allocation2 + $0x170] sm:$0xf]
    %v156 = vld [vmem:[#allocation2 + $0x174] sm:$0xf]
    %v157 = vld [vmem:[#allocation2 + $0x178] sm:$0xf]
    %v158 = vld [vmem:[#allocation2 + $0x17c] sm:$0xf]
    %v159 = vld [vmem:[#allocation2 + $0x180] sm:$0xf]
    %v160 = vld [vmem:[#allocation2 + $0x184] sm:$0xf]
    %v161 = vld [vmem:[%s2] sm:$0x1]
    %v163 = vperm.slane %v161, 0
    %v263 = vunpack.c.l.b16 %v63
    %v264 = vunpack.c.l.b16 %v64
    %v265 = vunpack.c.l.b16 %v65
    %v266 = vunpack.c.l.b16 %v66
    %v267 = vunpack.c.l.b16 %v67
    %v268 = vunpack.c.l.b16 %v68
    %v269 = vunpack.c.l.b16 %v69
    %v270 = vunpack.c.l.b16 %v70
    %v271 = vunpack.c.l.b16 %v71
    %v272 = vunpack.c.l.b16 %v72
    %v273 = vunpack.c.l.b16 %v73
    %v274 = vunpack.c.l.b16 %v74
    %v275 = vunpack.c.l.b16 %v75
    %v276 = vunpack.c.l.b16 %v76
    %v277 = vunpack.c.l.b16 %v77
    %v278 = vunpack.c.l.b16 %v78
    %v279 = vunpack.c.l.b16 %v79
    %v280 = vunpack.c.l.b16 %v80
    %v281 = vunpack.c.l.b16 %v81
    %v282 = vunpack.c.l.b16 %v82
    %v283 = vunpack.c.l.b16 %v83
    %v284 = vunpack.c.l.b16 %v84
    %v285 = vunpack.c.l.b16 %v85
    %v286 = vunpack.c.l.b16 %v86
    %v287 = vunpack.c.l.b16 %v87
    %v288 = vunpack.c.l.b16 %v88
    %v289 = vunpack.c.l.b16 %v89
    %v290 = vunpack.c.l.b16 %v90
    %v291 = vunpack.c.l.b16 %v91
    %v292 = vunpack.c.l.b16 %v92
    %v293 = vunpack.c.l.b16 %v93
    %v294 = vunpack.c.l.b16 %v94
    %v295 = vunpack.c.l.b16 %v95
    %v296 = vunpack.c.l.b16 %v96
    %v297 = vunpack.c.l.b16 %v97
    %v298 = vunpack.c.l.b16 %v98
    %v299 = vunpack.c.l.b16 %v99
    %v300 = vunpack.c.l.b16 %v100
    %v301 = vunpack.c.l.b16 %v101
    %v302 = vunpack.c.l.b16 %v102
    %v303 = vunpack.c.l.b16 %v103
    %v304 = vunpack.c.l.b16 %v104
    %v305 = vunpack.c.l.b16 %v105
    %v306 = vunpack.c.l.b16 %v106
    %v307 = vunpack.c.l.b16 %v107
    %v308 = vunpack.c.l.b16 %v108
    %v309 = vunpack.c.l.b16 %v109
    %v310 = vunpack.c.l.b16 %v110
    %v311 = vunpack.c.l.b16 %v111
    %v312 = vunpack.c.l.b16 %v112
    %v313 = vunpack.c.l.b16 %v113
    %v314 = vunpack.c.l.b16 %v114
    %v315 = vunpack.c.l.b16 %v115
    %v316 = vunpack.c.l.b16 %v116
    %v317 = vunpack.c.l.b16 %v117
    %v318 = vunpack.c.l.b16 %v118
    %v319 = vunpack.c.l.b16 %v119
    %v320 = vunpack.c.l.b16 %v120
    %v321 = vunpack.c.l.b16 %v121
    %v322 = vunpack.c.l.b16 %v122
    %v323 = vunpack.c.l.b16 %v123
    %v324 = vunpack.c.l.b16 %v124
    %v325 = vunpack.c.l.b16 %v125
    %v326 = vunpack.c.l.b16 %v126
    %v327 = vunpack.c.l.b16 %v127
    %v328 = vunpack.c.l.b16 %v128
    %v329 = vunpack.c.l.b16 %v129
    %v330 = vunpack.c.l.b16 %v130
    %v331 = vunpack.c.l.b16 %v131
    %v332 = vunpack.c.l.b16 %v132
    %v333 = vunpack.c.l.b16 %v133
    %v334 = vunpack.c.l.b16 %v134
    %v335 = vunpack.c.l.b16 %v135
    %v336 = vunpack.c.l.b16 %v136
    %v337 = vunpack.c.l.b16 %v137
    %v338 = vunpack.c.l.b16 %v138
    %v339 = vunpack.c.l.b16 %v139
    %v340 = vunpack.c.l.b16 %v140
    %v341 = vunpack.c.l.b16 %v141
    %v342 = vunpack.c.l.b16 %v142
    %v343 = vunpack.c.l.b16 %v143
    %v344 = vunpack.c.l.b16 %v144
    %v345 = vunpack.c.l.b16 %v145
    %v346 = vunpack.c.l.b16 %v146
    %v347 = vunpack.c.l.b16 %v147
    %v348 = vunpack.c.l.b16 %v148
    %v349 = vunpack.c.l.b16 %v149
    %v350 = vunpack.c.l.b16 %v150
    %v351 = vunpack.c.l.b16 %v151
    %v352 = vunpack.c.l.b16 %v152
    %v353 = vunpack.c.l.b16 %v153
    %v354 = vunpack.c.l.b16 %v154
    %v355 = vunpack.c.l.b16 %v155
    %v356 = vunpack.c.l.b16 %v156
    %v357 = vunpack.c.l.b16 %v157
    %v358 = vunpack.c.l.b16 %v158
    %v359 = vunpack.c.l.b16 %v159
    %v360 = vunpack.c.l.b16 %v160
    %v361 = vpack.c.b16 %v264, %v263
    %v362 = vpack.c.b16 %v266, %v265
    %v363 = vpack.c.b16 %v268, %v267
    %v364 = vpack.c.b16 %v270, %v269
    %v365 = vpack.c.b16 %v272, %v271
    %v366 = vpack.c.b16 %v274, %v273
    %v367 = vpack.c.b16 %v276, %v275
    %v368 = vpack.c.b16 %v278, %v277
    %v369 = vpack.c.b16 %v280, %v279
    %v370 = vpack.c.b16 %v282, %v281
    %v371 = vpack.c.b16 %v284, %v283
    %v372 = vpack.c.b16 %v286, %v285
    %v373 = vpack.c.b16 %v288, %v287
    %v374 = vpack.c.b16 %v290, %v289
    %v375 = vpack.c.b16 %v292, %v291
    %v376 = vpack.c.b16 %v294, %v293
    %v377 = vpack.c.b16 %v296, %v295
    %v378 = vpack.c.b16 %v298, %v297
    %v379 = vpack.c.b16 %v300, %v299
    %v380 = vpack.c.b16 %v302, %v301
    %v381 = vpack.c.b16 %v304, %v303
    %v382 = vpack.c.b16 %v306, %v305
    %v383 = vpack.c.b16 %v308, %v307
    %v384 = vpack.c.b16 %v310, %v309
    %v385 = vpack.c.b16 %v312, %v311
    %v386 = vpack.c.b16 %v314, %v313
    %v387 = vpack.c.b16 %v316, %v315
    %v388 = vpack.c.b16 %v318, %v317
    %v389 = vpack.c.b16 %v320, %v319
    %v390 = vpack.c.b16 %v322, %v321
    %v391 = vpack.c.b16 %v324, %v323
    %v392 = vpack.c.b16 %v326, %v325
    %v393 = vpack.c.b16 %v328, %v327
    %v394 = vpack.c.b16 %v330, %v329
    %v395 = vpack.c.b16 %v332, %v331
    %v396 = vpack.c.b16 %v334, %v333
    %v397 = vpack.c.b16 %v336, %v335
    %v398 = vpack.c.b16 %v338, %v337
    %v399 = vpack.c.b16 %v340, %v339
    %v400 = vpack.c.b16 %v342, %v341
    %v401 = vpack.c.b16 %v344, %v343
    %v402 = vpack.c.b16 %v346, %v345
    %v403 = vpack.c.b16 %v348, %v347
    %v404 = vpack.c.b16 %v350, %v349
    %v405 = vpack.c.b16 %v352, %v351
    %v406 = vpack.c.b16 %v354, %v353
    %v407 = vpack.c.b16 %v356, %v355
    %v408 = vpack.c.b16 %v358, %v357
    %v409 = vpack.c.b16 %v360, %v359
    %vm459 = vcmask 130048
    %v461 = vsel %vm459, %v62, 0
    %463 = vmatpush.bf16.msra.mxu0 %v368
    %464 = vmatpush.bf16.msra.mxu0 %v367
    %465 = vmatpush.bf16.msra.mxu0 %v366
    %466 = vmatpush.bf16.msra.mxu0 %v365
    %467 = vmatpush.bf16.msra.mxu0 %v364
    %468 = vmatpush.bf16.msra.mxu0 %v363
    %469 = vmatpush.bf16.msra.mxu0 %v362
    %470 = vmatpush.bf16.msra.mxu0 %v361
    %471 = vmatmul.bf16.gmra.mxu0 %v56
    %v472 = vpop.f32.mrf.mxu0
    %v473 = vadd.f32 %v163, %v472
    %v474 = vpop.f32.mrf.mxu0
    %475 = vdwg.mxu0
    %476 = vmatpush.bf16.msra.mxu0 %v376
    %477 = vmatpush.bf16.msra.mxu0 %v375
    %478 = vmatpush.bf16.msra.mxu0 %v374
    %479 = vmatpush.bf16.msra.mxu0 %v373
    %480 = vmatpush.bf16.msra.mxu0 %v372
    %481 = vmatpush.bf16.msra.mxu0 %v371
    %482 = vmatpush.bf16.msra.mxu0 %v370
    %483 = vmatpush.bf16.msra.mxu0 %v369
    %484 = vmatmul.bf16.gmra.mxu0 %v57
    %v485 = vpop.f32.mrf.mxu0
    %v486 = vadd.f32 %v473, %v485
    %v487 = vpop.f32.mrf.mxu0
    %488 = vdwg.mxu0
    %489 = vmatpush.bf16.msra.mxu0 %v384
    %490 = vmatpush.bf16.msra.mxu0 %v383
    %491 = vmatpush.bf16.msra.mxu0 %v382
    %492 = vmatpush.bf16.msra.mxu0 %v381
    %493 = vmatpush.bf16.msra.mxu0 %v380
    %494 = vmatpush.bf16.msra.mxu0 %v379
    %495 = vmatpush.bf16.msra.mxu0 %v378
    %496 = vmatpush.bf16.msra.mxu0 %v377
    %497 = vmatmul.bf16.gmra.mxu0 %v58
    %v498 = vpop.f32.mrf.mxu0
    %v499 = vadd.f32 %v486, %v498
    %v500 = vpop.f32.mrf.mxu0
    %501 = vdwg.mxu0
    %502 = vmatpush.bf16.msra.mxu0 %v392
    %503 = vmatpush.bf16.msra.mxu0 %v391
    %504 = vmatpush.bf16.msra.mxu0 %v390
    %505 = vmatpush.bf16.msra.mxu0 %v389
    %506 = vmatpush.bf16.msra.mxu0 %v388
    %507 = vmatpush.bf16.msra.mxu0 %v387
    %508 = vmatpush.bf16.msra.mxu0 %v386
    %509 = vmatpush.bf16.msra.mxu0 %v385
    %510 = vmatmul.bf16.gmra.mxu0 %v59
    %v511 = vpop.f32.mrf.mxu0
    %v512 = vadd.f32 %v499, %v511
    %v513 = vpop.f32.mrf.mxu0
    %514 = vdwg.mxu0
    %515 = vmatpush.bf16.msra.mxu0 %v400
    %516 = vmatpush.bf16.msra.mxu0 %v399
    %517 = vmatpush.bf16.msra.mxu0 %v398
    %518 = vmatpush.bf16.msra.mxu0 %v397
    %519 = vmatpush.bf16.msra.mxu0 %v396
    %520 = vmatpush.bf16.msra.mxu0 %v395
    %521 = vmatpush.bf16.msra.mxu0 %v394
    %522 = vmatpush.bf16.msra.mxu0 %v393
    %523 = vmatmul.bf16.gmra.mxu0 %v60
    %v524 = vpop.f32.mrf.mxu0
    %v525 = vadd.f32 %v512, %v524
    %v526 = vpop.f32.mrf.mxu0
    %527 = vdwg.mxu0
    %528 = vmatpush.bf16.msra.mxu0 %v408
    %529 = vmatpush.bf16.msra.mxu0 %v407
    %530 = vmatpush.bf16.msra.mxu0 %v406
    %531 = vmatpush.bf16.msra.mxu0 %v405
    %532 = vmatpush.bf16.msra.mxu0 %v404
    %533 = vmatpush.bf16.msra.mxu0 %v403
    %534 = vmatpush.bf16.msra.mxu0 %v402
    %535 = vmatpush.bf16.msra.mxu0 %v401
    %536 = vmatmul.bf16.gmra.mxu0 %v61
    %v537 = vpop.f32.mrf.mxu0
    %v538 = vadd.f32 %v525, %v537
    %v539 = vpop.f32.mrf.mxu0
    %540 = vdwg.mxu0
    %541 = vmatpush.bf16.msra.mxu0 0
    %542 = vmatpush.bf16.msra.mxu0 0
    %543 = vmatpush.bf16.msra.mxu0 0
    %544 = vmatpush.bf16.msra.mxu0 0
    %545 = vmatpush.bf16.msra.mxu0 0
    %546 = vmatpush.bf16.msra.mxu0 0
    %547 = vmatpush.bf16.msra.mxu0 0
    %548 = vmatpush.bf16.msra.mxu0 %v409
    %549 = vmatmul.bf16.gmra.mxu0 %v461
    %v550 = vpop.f32.mrf.mxu0
    %v551 = vadd.f32 %v538, %v550
    %v552 = vpop.f32.mrf.mxu0
    %553 = vdwg.mxu0
    %v554 = vmax.f32 %v551, 0.0
    %v555 = vld [vmem:[%s3] sm:$0xff]
    %v556 = vld [vmem:[%s3 + $0x8] sm:$0xff]
    %v557 = vld [vmem:[%s3 + $0x10] sm:$0xff]
    %v558 = vld [vmem:[%s3 + $0x18] sm:$0xff]
    %v559 = vld [vmem:[%s3 + $0x20] sm:$0xff]
    %v560 = vld [vmem:[%s3 + $0x28] sm:$0xff]
    %v561 = vld [vmem:[%s3 + $0x30] sm:$0xff]
    %v562 = vld [vmem:[%s3 + $0x38] sm:$0xff]
    %v563 = vld [vmem:[%s3 + $0x40] sm:$0xff]
    %v564 = vld [vmem:[%s3 + $0x48] sm:$0xff]
    %v565 = vld [vmem:[%s3 + $0x50] sm:$0xff]
    %v566 = vld [vmem:[%s3 + $0x58] sm:$0xff]
    %v567 = vld [vmem:[%s3 + $0x60] sm:$0xff]
    %v568 = vld [vmem:[%s3 + $0x68] sm:$0xff]
    %v569 = vld [vmem:[%s3 + $0x70] sm:$0xff]
    %v570 = vld [vmem:[%s3 + $0x78] sm:$0xff]
    %v571 = vld [vmem:[%s4] sm:$0x1]
    %v573 = vperm.slane %v571, 0
    %575 = vmatpush.msra.mxu0 %v570
    %576 = vmatpush.msra.mxu0 %v569
    %577 = vmatpush.msra.mxu0 %v568
    %578 = vmatpush.msra.mxu0 %v567
    %579 = vmatpush.msra.mxu0 %v566
    %580 = vmatpush.msra.mxu0 %v565
    %581 = vmatpush.msra.mxu0 %v564
    %582 = vmatpush.msra.mxu0 %v563
    %583 = vmatpush.msra.mxu0 %v562
    %584 = vmatpush.msra.mxu0 %v561
    %585 = vmatpush.msra.mxu0 %v560
    %586 = vmatpush.msra.mxu0 %v559
    %587 = vmatpush.msra.mxu0 %v558
    %588 = vmatpush.msra.mxu0 %v557
    %589 = vmatpush.msra.mxu0 %v556
    %590 = vmatpush.msra.mxu0 %v555
    %591 = vmatmul.f32.gmra.mxu0 %v554
    %v592 = vpop.f32.mrf.mxu0
    %v593 = vadd.f32 %v573, %v592
    %594 = vdwg.mxu0
    %v595 = vmul.f32 %v593, 0.5
    %v596 = vmul.f32 %v595, 1.442695
    %v597 = vpow.pop %v596
    %v598 = vld [vmem:[%s7] sm:$0xff]
    %600 = vrot.lane.b32.xlu0 %v598, 2
    %v601 = vpop.permute.xlu0 %600
    %v603 = vmul.f32 %v597, %v601
    %605 = vrot.lane.b32.xlu0 %v603, 126
    %v606 = vpop.permute.xlu0 %605
    %v608 = vadd.f32 %v593, %v606
    %v609 = vld [vmem:[%s6] sm:$0x7f]
    %v610 = vld [vmem:[%s5] ss:$2 sm:$0x7f]
    %612 = vset.pattern.permute.xlu0 0
    %613 = vperm.xlu0 %612, %v608
    %v614 = vpop.permute.xlu0 %613
    %v617 = vperm.slane %v610, 0
    %v618 = vperm.slane %v610, 1
    %v619 = vperm.slane %v610, 2
    %v620 = vperm.slane %v610, 3
    %v621 = vperm.slane %v610, 4
    %v622 = vperm.slane %v610, 5
    %v623 = vperm.slane %v610, 6
    %v631 = vmul.f32 %v614, %v617
    %v632 = vmul.f32 %v614, %v618
    %v633 = vmul.f32 %v614, %v619
    %v634 = vmul.f32 %v614, %v620
    %v635 = vmul.f32 %v614, %v621
    %v636 = vmul.f32 %v614, %v622
    %v637 = vmul.f32 %v614, %v623
    %v639 = vperm.slane %v609, 0
    %v640 = vperm.slane %v609, 1
    %v641 = vperm.slane %v609, 2
    %v642 = vperm.slane %v609, 3
    %v643 = vperm.slane %v609, 4
    %v644 = vperm.slane %v609, 5
    %v645 = vperm.slane %v609, 6
    %v653 = vadd.f32 %v639, %v631
    %v654 = vadd.f32 %v640, %v632
    %v655 = vadd.f32 %v641, %v633
    %v656 = vadd.f32 %v642, %v634
    %v657 = vadd.f32 %v643, %v635
    %v658 = vadd.f32 %v644, %v636
    %v659 = vadd.f32 %v645, %v637
    %s660 = scalar_lea.vmem %s5, 1
    %v661 = vld [vmem:[%s660] ss:$2 sm:$0x7f]
    %662 = vset.pattern.permute.xlu0 1
    %663 = vperm.xlu0 %662, %v608
    %v664 = vpop.permute.xlu0 %663
    %v667 = vperm.slane %v661, 0
    %v668 = vperm.slane %v661, 1
    %v669 = vperm.slane %v661, 2
    %v670 = vperm.slane %v661, 3
    %v671 = vperm.slane %v661, 4
    %v672 = vperm.slane %v661, 5
    %v673 = vperm.slane %v661, 6
    %v681 = vmul.f32 %v664, %v667
    %v682 = vmul.f32 %v664, %v668
    %v683 = vmul.f32 %v664, %v669
    %v684 = vmul.f32 %v664, %v670
    %v685 = vmul.f32 %v664, %v671
    %v686 = vmul.f32 %v664, %v672
    %v687 = vmul.f32 %v664, %v673
    %v688 = vadd.f32 %v653, %v681
    %v689 = vadd.f32 %v654, %v682
    %v690 = vadd.f32 %v655, %v683
    %v691 = vadd.f32 %v656, %v684
    %v692 = vadd.f32 %v657, %v685
    %v693 = vadd.f32 %v658, %v686
    %v694 = vadd.f32 %v659, %v687
    %v695 = vxor.u32 %v688, 2147483648
    %v696 = vxor.u32 %v689, 2147483648
    %v697 = vxor.u32 %v690, 2147483648
    %v698 = vxor.u32 %v691, 2147483648
    %v699 = vxor.u32 %v692, 2147483648
    %v700 = vxor.u32 %v693, 2147483648
    %v701 = vxor.u32 %v694, 2147483648
    %v702 = vmul.f32 %v695, 1.442695
    %v703 = vpow.pop %v702
    %v704 = vmul.f32 %v696, 1.442695
    %v705 = vpow.pop %v704
    %v706 = vmul.f32 %v697, 1.442695
    %v707 = vpow.pop %v706
    %v708 = vmul.f32 %v698, 1.442695
    %v709 = vpow.pop %v708
    %v710 = vmul.f32 %v699, 1.442695
    %v711 = vpow.pop %v710
    %v712 = vmul.f32 %v700, 1.442695
    %v713 = vpow.pop %v712
    %v714 = vmul.f32 %v701, 1.442695
    %v715 = vpow.pop %v714
    %v716 = vadd.f32 %v703, 1.0
    %v717 = vadd.f32 %v705, 1.0
    %v718 = vadd.f32 %v707, 1.0
    %v719 = vadd.f32 %v709, 1.0
    %v720 = vadd.f32 %v711, 1.0
    %v721 = vadd.f32 %v713, 1.0
    %v722 = vadd.f32 %v715, 1.0
    %v723 = vrcp.pop %v716
    %v724 = vmul.f32 %v716, %v723
    %v725 = vsub.f32 1.0, %v724
    %v726 = vmul.f32 %v723, %v725
    %v727 = vadd.f32 %v723, %v726
    %vm728 = vweird.f32 %v716
    %vm729 = vweird.f32 %v723
    %vm730 = vmor %vm728, %vm729
    %v731 = vsel %vm730, %v723, %v727
    %v732 = vand.u32 2147483647, %v716
    %vm733 = vcmp.eq.f32.partialorder %v732, 8.507059e+37
    %v734 = vand.u32 %v716, 2147483648
    %v735 = vor.u32 1.1754944e-38, %v734
    %v736 = vsel %vm733, %v735, %v731
    %v737 = vmul.f32 1.0, %v736
    %v738 = vrcp.pop %v717
    %v739 = vmul.f32 %v717, %v738
    %v740 = vsub.f32 1.0, %v739
    %v741 = vmul.f32 %v738, %v740
    %v742 = vadd.f32 %v738, %v741
    %vm743 = vweird.f32 %v717
    %vm744 = vweird.f32 %v738
    %vm745 = vmor %vm743, %vm744
    %v746 = vsel %vm745, %v738, %v742
    %v747 = vand.u32 2147483647, %v717
    %vm748 = vcmp.eq.f32.partialorder %v747, 8.507059e+37
    %v749 = vand.u32 %v717, 2147483648
    %v750 = vor.u32 1.1754944e-38, %v749
    %v751 = vsel %vm748, %v750, %v746
    %v752 = vmul.f32 1.0, %v751
    %v753 = vrcp.pop %v718
    %v754 = vmul.f32 %v718, %v753
    %v755 = vsub.f32 1.0, %v754
    %v756 = vmul.f32 %v753, %v755
    %v757 = vadd.f32 %v753, %v756
    %vm758 = vweird.f32 %v718
    %vm759 = vweird.f32 %v753
    %vm760 = vmor %vm758, %vm759
    %v761 = vsel %vm760, %v753, %v757
    %v762 = vand.u32 2147483647, %v718
    %vm763 = vcmp.eq.f32.partialorder %v762, 8.507059e+37
    %v764 = vand.u32 %v718, 2147483648
    %v765 = vor.u32 1.1754944e-38, %v764
    %v766 = vsel %vm763, %v765, %v761
    %v767 = vmul.f32 1.0, %v766
    %v768 = vrcp.pop %v719
    %v769 = vmul.f32 %v719, %v768
    %v770 = vsub.f32 1.0, %v769
    %v771 = vmul.f32 %v768, %v770
    %v772 = vadd.f32 %v768, %v771
    %vm773 = vweird.f32 %v719
    %vm774 = vweird.f32 %v768
    %vm775 = vmor %vm773, %vm774
    %v776 = vsel %vm775, %v768, %v772
    %v777 = vand.u32 2147483647, %v719
    %vm778 = vcmp.eq.f32.partialorder %v777, 8.507059e+37
    %v779 = vand.u32 %v719, 2147483648
    %v780 = vor.u32 1.1754944e-38, %v779
    %v781 = vsel %vm778, %v780, %v776
    %v782 = vmul.f32 1.0, %v781
    %v783 = vrcp.pop %v720
    %v784 = vmul.f32 %v720, %v783
    %v785 = vsub.f32 1.0, %v784
    %v786 = vmul.f32 %v783, %v785
    %v787 = vadd.f32 %v783, %v786
    %vm788 = vweird.f32 %v720
    %vm789 = vweird.f32 %v783
    %vm790 = vmor %vm788, %vm789
    %v791 = vsel %vm790, %v783, %v787
    %v792 = vand.u32 2147483647, %v720
    %vm793 = vcmp.eq.f32.partialorder %v792, 8.507059e+37
    %v794 = vand.u32 %v720, 2147483648
    %v795 = vor.u32 1.1754944e-38, %v794
    %v796 = vsel %vm793, %v795, %v791
    %v797 = vmul.f32 1.0, %v796
    %v798 = vrcp.pop %v721
    %v799 = vmul.f32 %v721, %v798
    %v800 = vsub.f32 1.0, %v799
    %v801 = vmul.f32 %v798, %v800
    %v802 = vadd.f32 %v798, %v801
    %vm803 = vweird.f32 %v721
    %vm804 = vweird.f32 %v798
    %vm805 = vmor %vm803, %vm804
    %v806 = vsel %vm805, %v798, %v802
    %v807 = vand.u32 2147483647, %v721
    %vm808 = vcmp.eq.f32.partialorder %v807, 8.507059e+37
    %v809 = vand.u32 %v721, 2147483648
    %v810 = vor.u32 1.1754944e-38, %v809
    %v811 = vsel %vm808, %v810, %v806
    %v812 = vmul.f32 1.0, %v811
    %v813 = vrcp.pop %v722
    %v814 = vmul.f32 %v722, %v813
    %v815 = vsub.f32 1.0, %v814
    %v816 = vmul.f32 %v813, %v815
    %v817 = vadd.f32 %v813, %v816
    %vm818 = vweird.f32 %v722
    %vm819 = vweird.f32 %v813
    %vm820 = vmor %vm818, %vm819
    %v821 = vsel %vm820, %v813, %v817
    %v822 = vand.u32 2147483647, %v722
    %vm823 = vcmp.eq.f32.partialorder %v822, 8.507059e+37
    %v824 = vand.u32 %v722, 2147483648
    %v825 = vor.u32 1.1754944e-38, %v824
    %v826 = vsel %vm823, %v825, %v821
    %v827 = vmul.f32 1.0, %v826
    %828 = vst [vmem:[#allocation5] sm:$0xff] %v737
    %829 = vst [vmem:[#allocation5 + $0x8] sm:$0xff] %v752
    %830 = vst [vmem:[#allocation5 + $0x10] sm:$0xff] %v767
    %831 = vst [vmem:[#allocation5 + $0x18] sm:$0xff] %v782
    %832 = vst [vmem:[#allocation5 + $0x20] sm:$0xff] %v797
    %833 = vst [vmem:[#allocation5 + $0x28] sm:$0xff] %v812
    %834 = vst.msk [vmem:[#allocation5 + $0x30] sm:$0xff] %vm459, %v827
    %vm835 = vcmask 31744
    %836 = vst.msk [vmem:[%s9] sm:$0xff] %vm835, %v593
    // Predicated region
    $region38: #{vae_forward.1} parent=1 // pred_check
      _
    $region39: #{vae_forward.1} parent=1 // pred_check_branch
      %838 = sbr.rel (0) target = $region41
    $region40: #{vae_forward.1} parent=1 // pred_region
      %840 = vsyncadd [#allocation4], 0
      %s842 = sshll.u32 [#allocation5], 4
      %s843 = int_to_ptr.vmem [resolvable:$true] %s842
      %s844 = sshll.u32 %s8, 4
      %s845 = int_to_ptr.hbm [resolvable:$true] %s844
      %847 = dma.vmem_to_hbm [thread:$0]  %s843, 896, %s845, [#allocation4]
    $region41: #{vae_forward.1} parent=1 // pred_fallthru
      _
    // Predicated region
    $region42: #{vae_forward.1} parent=1 // pred_check
      _
    $region43: #{vae_forward.1} parent=1 // pred_check_branch
      %849 = sbr.rel (0) target = $region45
    $region44: #{vae_forward.1} parent=1 // pred_region
      _
    $region45: #{vae_forward.1} parent=1 // pred_fallthru
      _
    // Predicated region
    $region46: #{vae_forward.1} parent=1 // pred_check
      _
    $region47: #{vae_forward.1} parent=1 // pred_check_branch
      %851 = sbr.rel (0) target = $region49
    $region48: #{vae_forward.1} parent=1 // pred_region
      %853 = dma.done [#allocation4], 896
    $region49: #{vae_forward.1} parent=1 // pred_fallthru
      _
    // Predicated region
    $region50: #{vae_forward.1} parent=1 // pred_check
      _
    $region51: #{vae_forward.1} parent=1 // pred_check_branch
      %855 = sbr.rel (0) target = $region53
    $region52: #{vae_forward.1} parent=1 // pred_region
      _
    $region53: #{vae_forward.1} parent=1 // pred_fallthru
      _
    %856 = vsyncpa [#allocation3], 1
    %857 = vsyncpa [#allocation4], 1

</llo_original>
